<compile_context>
chip_gen: v5e
topology: v5e:2x2
jax: 0.10.0
libtpu: 0.0.40
codegen_flags: <defaults>
</compile_context>

<pallas_src>
import functools

import jax
import jax.numpy as jnp
from jax.experimental import pallas as pl
from jax.experimental.pallas import tpu as pltpu

BN_EPS = 1e-5
ACT_DTYPE = jnp.bfloat16


# -----------------------------------------------------------------------------
# Pallas kernel: tiled bf16 matmul + fused BN scale/bias (+ residual) (+ ReLU)
# -----------------------------------------------------------------------------
def _mm_bn_act_kernel(x_ref, w_ref, s_ref, b_ref, *rest, relu, has_res):
    if has_res:
        r_ref, o_ref, acc_ref = rest
    else:
        o_ref, acc_ref = rest

    @pl.when(pl.program_id(2) == 0)
    def _():
        acc_ref[...] = jnp.zeros_like(acc_ref)

    acc_ref[...] += jnp.dot(x_ref[...], w_ref[...],
                            preferred_element_type=jnp.float32)

    @pl.when(pl.program_id(2) == pl.num_programs(2) - 1)
    def _():
        y = acc_ref[...] * s_ref[...] + b_ref[...]
        if has_res:
            y = y + r_ref[...].astype(jnp.float32)
        if relu:
            y = jnp.maximum(y, 0.0)
        o_ref[...] = y.astype(o_ref.dtype)


def _round_up(x, m):
    return (x + m - 1) // m * m


def _pick_tile(dim, candidates):
    for c in candidates:
        if dim % c == 0:
            return c
    return candidates[-1]


def _matmul_bn_act(xp, wp, sp, bp, resp, *, tm, tn, tk, relu):
    """xp:(Mp,Kp) bf16, wp:(Kp,Np) bf16, sp/bp:(1,Np) f32, resp:(Mp,Np) bf16|None.
    All shapes pre-padded to tile multiples.  Returns (Mp,Np) bf16."""
    Mp, Kp = xp.shape
    _, Np = wp.shape
    grid = (Mp // tm, Np // tn, Kp // tk)
    has_res = resp is not None

    in_specs = [
        pl.BlockSpec((tm, tk), lambda i, j, k: (i, k)),
        pl.BlockSpec((tk, tn), lambda i, j, k: (k, j)),
        pl.BlockSpec((1, tn), lambda i, j, k: (0, j)),
        pl.BlockSpec((1, tn), lambda i, j, k: (0, j)),
    ]
    args = [xp, wp, sp, bp]
    if has_res:
        in_specs.append(pl.BlockSpec((tm, tn), lambda i, j, k: (i, j)))
        args.append(resp)

    return pl.pallas_call(
        functools.partial(_mm_bn_act_kernel, relu=relu, has_res=has_res),
        out_shape=jax.ShapeDtypeStruct((Mp, Np), ACT_DTYPE),
        grid_spec=pltpu.PrefetchScalarGridSpec(
            num_scalar_prefetch=0,
            grid=grid,
            in_specs=in_specs,
            out_specs=pl.BlockSpec((tm, tn), lambda i, j, k: (i, j)),
            scratch_shapes=[pltpu.VMEM((tm, tn), jnp.float32)],
        ),
        compiler_params=pltpu.CompilerParams(
            dimension_semantics=("parallel", "parallel", "arbitrary"),
            # Largest tiling (256x512x512 bf16, double-buffered, + f32 acc) is
            # ~3 MiB; 32 MiB scoped VMEM is safe on v5e/v6e/v7x alike.
            vmem_limit_bytes=32 * 1024 * 1024),
    )(*args)


# -----------------------------------------------------------------------------
# Conv glue: 1x1 fast path, bf16 im2col for 3x3 / 7x7
# -----------------------------------------------------------------------------
def _im2col(x, kh, kw, stride, pad):
    # TODO(synk): 3x3/7x7 convs still materialize the im2col patch tensor in
    # HBM (bf16 halves its bytes); 1x1 convs bypass this entirely.
    n, h, w, c = x.shape
    xp = jnp.pad(x, ((0, 0), (pad, pad), (pad, pad), (0, 0)))
    oh = (h + 2 * pad - kh) // stride + 1
    ow = (w + 2 * pad - kw) // stride + 1
    cols = []
    for i in range(kh):
        for j in range(kw):
            cols.append(xp[:, i:i + (oh - 1) * stride + 1:stride,
                           j:j + (ow - 1) * stride + 1:stride, :])
    patches = jnp.stack(cols, axis=3)              # (N, OH, OW, KH*KW, C)
    return patches.reshape(n * oh * ow, kh * kw * c), oh, ow


@functools.partial(
    jax.jit, static_argnames=("kh", "kw", "cout", "stride", "pad", "relu"))
def conv_bn(x, w, scale, bias, residual=None, *,
            kh, kw, cout, stride, pad, relu):
    """x: NHWC bf16.  w: pre-padded (Kp,Np) bf16 (OIHW -> (KH*KW*Cin, Cout)).
    scale/bias: (1,Np) f32 folded BatchNorm.  residual: NHWC bf16 or None.
    Computes conv + BN (+ residual add) (+ ReLU), fully fused in one kernel."""
    n, h, wdim, cin = x.shape
    if kh == 1 and kw == 1 and pad == 0:
        xs = x[:, ::stride, ::stride, :] if stride > 1 else x
        oh, ow = xs.shape[1], xs.shape[2]
        patches = xs.reshape(n * oh * ow, cin)
    else:
        patches, oh, ow = _im2col(x, kh, kw, stride, pad)

    M, K = patches.shape
    Kp, Np = w.shape

    # Tile selection (all static under jit).
    if M >= 256:
        tm = 256
        Mp = _round_up(M, tm)
    else:
        Mp = _round_up(M, 16)       # bf16 sublane-pack friendly
        tm = Mp
    tn = _pick_tile(Np, (512, 256, 128))
    tk = _pick_tile(Kp, (512, 384, 256, 128))

    xp = jnp.pad(patches, ((0, Mp - M), (0, Kp - K)))
    resp = None
    if residual is not None:
        resp = jnp.pad(residual.reshape(M, cout),
                       ((0, Mp - M), (0, Np - cout)))

    y = _matmul_bn_act(xp, w, scale, bias, resp, tm=tm, tn=tn, tk=tk, relu=relu)
    return y[:M, :cout].reshape(n, oh, ow, cout)


@jax.jit
def maxpool_3x3_s2(x):
    # TODO(synk): maxpool kept as plain-JAX reduce_window (not a hot path).
    init = jnp.array(-jnp.inf, x.dtype)
    return jax.lax.reduce_window(
        x, init, jax.lax.max,
        window_dimensions=(1, 3, 3, 1),
        window_strides=(1, 2, 2, 1),
        padding=((0, 0), (1, 1), (1, 1), (0, 0)))


@jax.jit
def _head(x, fc_w_t, fc_b):
    feat = jnp.mean(x.astype(jnp.float32), axis=(1, 2))   # (N, 2048)
    # Tiny FC (batch x 2048 @ 2048 x num_classes): plain XLA matmul; a padded
    # 128x128 Pallas tile would waste >98% of the MXU here.
    return feat @ fc_w_t + fc_b


# -----------------------------------------------------------------------------
# ResNet-50 parameters (deterministic synthetic init, PyTorch-default BN stats)
# -----------------------------------------------------------------------------
def make_params(num_classes, key):
    keys = iter(jax.random.split(key, 256))

    def conv(cout, cin, kh, kw):
        fan_in = cin * kh * kw
        return (jax.random.normal(next(keys), (cout, cin, kh, kw), jnp.float32)
                * jnp.sqrt(2.0 / fan_in))

    def bn(c):
        return {"gamma": jnp.ones((c,), jnp.float32),
                "beta": jnp.zeros((c,), jnp.float32),
                "mean": jnp.zeros((c,), jnp.float32),
                "var": jnp.ones((c,), jnp.float32)}

    params = {"conv1": conv(64, 3, 7, 7), "bn1": bn(64), "layers": []}

    inplanes = 64
    for planes, nblocks, stride in [(64, 3, 1), (128, 4, 2),
                                    (256, 6, 2), (512, 3, 2)]:
        blocks = []
        for b in range(nblocks):
            s = stride if b == 0 else 1
            blk = {
                "conv1": conv(planes, inplanes, 1, 1), "bn1": bn(planes),
                "conv2": conv(planes, planes, 3, 3), "bn2": bn(planes),
                "conv3": conv(planes * 4, planes, 1, 1), "bn3": bn(planes * 4),
                "stride": s,
            }
            if s != 1 or inplanes != planes * 4:
                blk["down_conv"] = conv(planes * 4, inplanes, 1, 1)
                blk["down_bn"] = bn(planes * 4)
            blocks.append(blk)
            inplanes = planes * 4
        params["layers"].append(blocks)

    fan_in = 2048
    params["fc_w"] = (jax.random.normal(next(keys), (num_classes, fan_in),
                                        jnp.float32) / jnp.sqrt(fan_in))
    params["fc_b"] = jnp.zeros((num_classes,), jnp.float32)
    return params


# -----------------------------------------------------------------------------
# One-time parameter preparation: BN fold, OIHW -> (K, N), pad to 128, bf16
# -----------------------------------------------------------------------------
def _prep_conv(w_oihw, bn, *, stride, pad):
    cout, cin, kh, kw = w_oihw.shape
    K = kh * kw * cin
    Kp = _round_up(K, 128)
    Np = _round_up(cout, 128)
    w2 = jnp.transpose(w_oihw, (2, 3, 1, 0)).reshape(K, cout)
    w2 = jnp.pad(w2, ((0, Kp - K), (0, Np - cout))).astype(ACT_DTYPE)
    scale = bn["gamma"] / jnp.sqrt(bn["var"] + BN_EPS)
    bias = bn["beta"] - bn["mean"] * scale
    scale = jnp.pad(scale, (0, Np - cout)).reshape(1, Np).astype(jnp.float32)
    bias = jnp.pad(bias, (0, Np - cout)).reshape(1, Np).astype(jnp.float32)
    return {"w": w2, "scale": scale, "bias": bias,
            "kh": kh, "kw": kw, "cout": cout, "stride": stride, "pad": pad}


def prepare_params(params):
    prep = {"conv1": _prep_conv(params["conv1"], params["bn1"], stride=2, pad=3),
            "layers": []}
    for blocks in params["layers"]:
        pblocks = []
        for blk in blocks:
            pblk = {
                "conv1": _prep_conv(blk["conv1"], blk["bn1"], stride=1, pad=0),
                "conv2": _prep_conv(blk["conv2"], blk["bn2"],
                                    stride=blk["stride"], pad=1),
                "conv3": _prep_conv(blk["conv3"], blk["bn3"], stride=1, pad=0),
            }
            if "down_conv" in blk:
                pblk["down"] = _prep_conv(blk["down_conv"], blk["down_bn"],
                                          stride=blk["stride"], pad=0)
            pblocks.append(pblk)
        prep["layers"].append(pblocks)
    prep["fc_w_t"] = params["fc_w"].T          # (2048, num_classes), f32
    prep["fc_b"] = params["fc_b"]
    return prep


# -----------------------------------------------------------------------------
# Forward pass
# -----------------------------------------------------------------------------
def _apply_conv(x, p, *, relu, residual=None):
    return conv_bn(x, p["w"], p["scale"], p["bias"], residual,
                   kh=p["kh"], kw=p["kw"], cout=p["cout"],
                   stride=p["stride"], pad=p["pad"], relu=relu)


def bottleneck(x, blk):
    out = _apply_conv(x, blk["conv1"], relu=True)
    out = _apply_conv(out, blk["conv2"], relu=True)
    if "down" in blk:
        identity = _apply_conv(x, blk["down"], relu=False)
    else:
        identity = x
    # Residual add + ReLU fused into the conv3 matmul epilogue.
    return _apply_conv(out, blk["conv3"], relu=True, residual=identity)


def resnet50_forward(x_nchw, prep):
    x = jnp.transpose(x_nchw, (0, 2, 3, 1)).astype(ACT_DTYPE)  # NCHW -> NHWC bf16
    x = _apply_conv(x, prep["conv1"], relu=True)
    x = maxpool_3x3_s2(x)
    for blocks in prep["layers"]:
        for blk in blocks:
            x = bottleneck(x, blk)
    return _head(x, prep["fc_w_t"], prep["fc_b"])


if __name__ == "__main__":
    num_classes = 10
    key = jax.random.PRNGKey(0)
    pkey, xkey = jax.random.split(key)
    params = make_params(num_classes, pkey)
    prep = prepare_params(params)   # one-time: BN fold, reshape/pad/bf16 cast
    x = jax.random.normal(xkey, (2, 3, 32, 32), jnp.float32)   # NCHW, like PyTorch

    logits = resnet50_forward(x, prep)
    logits = jax.block_until_ready(logits)
    assert logits.shape == (2, num_classes), logits.shape
    assert bool(jnp.all(jnp.isfinite(logits)))
    print("KERNEL_OK")
</pallas_src>

<mosaic_0001>
module attributes {stable_mosaic.version = 11 : i64} {
  func.func @_mm_bn_act_kernel(%arg0: i32, %arg1: i32, %arg2: i32, %arg3: memref<256x256xbf16, #tpu.memory_space<vmem>>, %arg4: memref<256x128xbf16, #tpu.memory_space<vmem>>, %arg5: memref<1x128xf32, #tpu.memory_space<vmem>>, %arg6: memref<1x128xf32, #tpu.memory_space<vmem>>, %arg7: memref<256x128xbf16, #tpu.memory_space<vmem>>, %arg8: memref<256x128xf32, #tpu.memory_space<vmem>>) attributes {dimension_semantics = [#tpu.dimension_semantics<parallel>, #tpu.dimension_semantics<parallel>, #tpu.dimension_semantics<arbitrary>], iteration_bounds = array<i64: 2, 1, 1>, scalar_prefetch = 0 : i64, scratch_operands = 1 : i64, tpu.core_type = #tpu.core_type<tc>, window_params = [{transform_indices = @transform_0, window_bounds = array<i64: 256, 256>}, {transform_indices = @transform_1, window_bounds = array<i64: 256, 128>}, {transform_indices = @transform_2, window_bounds = array<i64: 1, 128>}, {transform_indices = @transform_3, window_bounds = array<i64: 1, 128>}, {transform_indices = @transform_4, window_bounds = array<i64: 256, 128>}]} {
    %c0_i32 = arith.constant 0 : i32
    %0 = arith.cmpi eq, %arg2, %c0_i32 : i32
    %1 = arith.extui %0 : i1 to i32
    %c0_i32_0 = arith.constant 0 : i32
    %2 = arith.cmpi ne, %1, %c0_i32_0 : i32
    scf.if %2 {
      %cst_10 = arith.constant 0.000000e+00 : f32
      %12 = vector.broadcast %cst_10 : f32 to vector<256x128xf32>
      %c0_11 = arith.constant 0 : index
      %c0_12 = arith.constant 0 : index
      %13 = vector.load %arg8[%c0_11, %c0_12] : memref<256x128xf32, #tpu.memory_space<vmem>>, vector<256x128xf32>
      tpu.vector_store %arg8[%c0_11, %c0_12], %12 {strides = array<i32>} : memref<256x128xf32, #tpu.memory_space<vmem>>, vector<256x128xf32>,
    } else {
    }
    %c0 = arith.constant 0 : index
    %c0_1 = arith.constant 0 : index
    %3 = vector.load %arg8[%c0, %c0_1] : memref<256x128xf32, #tpu.memory_space<vmem>>, vector<256x128xf32>
    %c0_2 = arith.constant 0 : index
    %c0_3 = arith.constant 0 : index
    %4 = vector.load %arg3[%c0_2, %c0_3] : memref<256x256xbf16, #tpu.memory_space<vmem>>, vector<256x256xbf16>
    %c0_4 = arith.constant 0 : index
    %c0_5 = arith.constant 0 : index
    %5 = vector.load %arg4[%c0_4, %c0_5] : memref<256x128xbf16, #tpu.memory_space<vmem>>, vector<256x128xbf16>
    %cst = arith.constant dense<0.000000e+00> : vector<256x128xf32>
    %6 = tpu.matmul %4, %5, %cst {dimension_numbers = #tpu.dot_dimension_numbers<[1], [0], [0], [1], [0, 0, 1, 1], [], []>} : vector<256x256xbf16>, vector<256x128xbf16>, vector<256x128xf32> -> vector<256x128xf32>
    %7 = arith.addf %3, %6 : vector<256x128xf32>
    %c0_6 = arith.constant 0 : index
    %c0_7 = arith.constant 0 : index
    %8 = vector.load %arg8[%c0_6, %c0_7] : memref<256x128xf32, #tpu.memory_space<vmem>>, vector<256x128xf32>
    tpu.vector_store %arg8[%c0_6, %c0_7], %7 {strides = array<i32>} : memref<256x128xf32, #tpu.memory_space<vmem>>, vector<256x128xf32>,
    %c0_i32_8 = arith.constant 0 : i32
    %9 = arith.cmpi eq, %arg2, %c0_i32_8 : i32
    %10 = arith.extui %9 : i1 to i32
    %c0_i32_9 = arith.constant 0 : i32
    %11 = arith.cmpi ne, %10, %c0_i32_9 : i32
    scf.if %11 {
      %c0_10 = arith.constant 0 : index
      %c0_11 = arith.constant 0 : index
      %12 = vector.load %arg8[%c0_10, %c0_11] : memref<256x128xf32, #tpu.memory_space<vmem>>, vector<256x128xf32>
      %c0_12 = arith.constant 0 : index
      %c0_13 = arith.constant 0 : index
      %13 = vector.load %arg5[%c0_12, %c0_13] : memref<1x128xf32, #tpu.memory_space<vmem>>, vector<1x128xf32>
      %14 = vector.broadcast %13 : vector<1x128xf32> to vector<256x128xf32>
      %15 = arith.mulf %12, %14 : vector<256x128xf32>
      %c0_14 = arith.constant 0 : index
      %c0_15 = arith.constant 0 : index
      %16 = vector.load %arg6[%c0_14, %c0_15] : memref<1x128xf32, #tpu.memory_space<vmem>>, vector<1x128xf32>
      %17 = vector.broadcast %16 : vector<1x128xf32> to vector<256x128xf32>
      %18 = arith.addf %15, %17 : vector<256x128xf32>
      %cst_16 = arith.constant 0.000000e+00 : f32
      %19 = vector.broadcast %cst_16 : f32 to vector<256x128xf32>
      %20 = arith.maximumf %18, %19 : vector<256x128xf32>
      %21 = arith.truncf %20 : vector<256x128xf32> to vector<256x128xbf16>
      %c0_17 = arith.constant 0 : index
      %c0_18 = arith.constant 0 : index
      %22 = vector.load %arg7[%c0_17, %c0_18] : memref<256x128xbf16, #tpu.memory_space<vmem>>, vector<256x128xbf16>
      tpu.vector_store %arg7[%c0_17, %c0_18], %21 {strides = array<i32>} : memref<256x128xbf16, #tpu.memory_space<vmem>>, vector<256x128xbf16>,
    } else {
    }
    return
  }
  func.func @transform_0(%arg0: i32, %arg1: i32, %arg2: i32) -> (i32, i32) {
    %c0_i32 = arith.constant 0 : i32
    return %arg0, %arg2 : i32, i32
  }
  func.func @transform_1(%arg0: i32, %arg1: i32, %arg2: i32) -> (i32, i32) {
    %c0_i32 = arith.constant 0 : i32
    return %arg2, %arg1 : i32, i32
  }
  func.func @transform_2(%arg0: i32, %arg1: i32, %arg2: i32) -> (i32, i32) {
    %c0_i32 = arith.constant 0 : i32
    %c0_i32_0 = arith.constant 0 : i32
    return %c0_i32, %arg1 : i32, i32
  }
  func.func @transform_3(%arg0: i32, %arg1: i32, %arg2: i32) -> (i32, i32) {
    %c0_i32 = arith.constant 0 : i32
    %c0_i32_0 = arith.constant 0 : i32
    return %c0_i32, %arg1 : i32, i32
  }
  func.func @transform_4(%arg0: i32, %arg1: i32, %arg2: i32) -> (i32, i32) {
    %c0_i32 = arith.constant 0 : i32
    return %arg0, %arg1 : i32, i32
  }
}

</mosaic_0001>

<llo_original>
// kernel: conv_bn.1
$region0: #{conv_bn.1}
  #allocation0 [shape = 'u32[]', space=smem, size = 0x4, offset = 0x4, fixed_abs, tag = 'smem constant byte address 0x4 - core index']
  #allocation1 [shape = 'u32[72,128]{1,0:T(1,128)}', space=vmem, size = 0x9000, scoped, tag = 'internal scratch']
  #allocation2 [shape = 'f32[256,128]{1,0:T(8,128)}', space=vmem, size = 0x20000, scoped, tag = 'scratch operand']
  %s0 = inlined_call_operand.vmem [shape: bf16[512,256], index: 0, kind: input, shape index: {}]
  %s1 = inlined_call_operand.vmem [shape: bf16[256,128], index: 1, kind: input, shape index: {}]
  %s2 = inlined_call_operand.vmem [shape: f32[1,128], index: 2, kind: input, shape index: {}]
  %s3 = inlined_call_operand.vmem [shape: f32[1,128], index: 3, kind: input, shape index: {}]
  %s4 = inlined_call_operand.hbm [shape: bf16[512,128], index: 4, kind: output, shape index: {}]
  %s5 = sld [smem:[#allocation0]]
  $region57: #{conv_bn.1} parent=0
    _
  %s7 = ssub.s32 1, %s5
  %s8 = scalar_select 0, %s7, %s5
  $region1: #{conv_bn.1} parent=0
    #allocation3 [shape = 'u8[131072]{0}', space=vmem, size = 0x20000, scoped, tag = 'output window, operand 0']
    #allocation4 [shape = 's32[2]{0}', space=sflag, size = 0x8, scoped, tag = 'scoped memory for conv_bn.1']
    %9 = vsyncpa [#allocation4], 0
    %s10 = scalar_lea.sflag [#allocation4], 1
    %11 = vsyncpa %s10, 0
    loop: start=0, step=1, limit=4
    $region2: #{conv_bn.1} parent=1 // loop_pre_header
      _
    $region3: #{conv_bn.1} parent=1 // loop_header
      %s13 = sphi 0, %s17
      %p14 = scmp.ge.s32.totalorder %s13, 4
      %s20 = sphi 0, %s39
      %s21 = sphi 0, %s35
      %s22 = sphi 0, %s31
      %s23 = sphi 0, %s20
      %s24 = sphi 0, %s21
      %s25 = sphi 0, %s22
      %s26 = sphi 0, %s23
      %s27 = sphi 0, %s24
      %s28 = sphi 0, %s25
      %s44 = sphi 0, %s46
      %s47 = sphi 0, %s44
      %s48 = sphi 0, %s47
      %s64 = sphi 0, %s48
      %s72 = sphi 0, %s74
      %s75 = sphi 0, %s72
      %s76 = sphi 0, %s75
      %s92 = sphi 0, %s76
      %s98 = sphi 0, %s100
      %s101 = sphi 0, %s98
      %s102 = sphi 0, %s101
      %s118 = sphi 0, %s102
      %s124 = sphi 0, %s126
      %s127 = sphi 0, %s124
      %s128 = sphi 0, %s127
      %s144 = sphi 0, %s128
      %s152 = sphi 0, %s154
      %s155 = sphi 0, %s152
      %s156 = sphi 0, %s155
      %s172 = sphi 0, %s156
    $region4: #{conv_bn.1} parent=1 // loop_header_branch
      %16 = sbr.rel (%p14) target = $region8
    $region5: #{conv_bn.1} parent=1 // loop_body
      %s18 = ssub.s32 %s13, 1
      %s19 = ssub.s32 %s13, 2
      %s29 = sadd.s32 1, %s22
      %p30 = scmp.ge.s32.totalorder %s29, 1
      %s31 = scalar_select %p30, 0, %s29
      %s32 = sadd.s32 1, %s21
      %s33 = scalar_select %p30, %s32, %s21
      %p34 = scmp.ge.s32.totalorder %s33, 1
      %s35 = scalar_select %p34, 0, %s33
      %s36 = sadd.s32 1, %s20
      %s37 = scalar_select %p34, %s36, %s20
      %p38 = scmp.ge.s32.totalorder %s37, 2
      %s39 = scalar_select %p38, 0, %s37
      %s40 = ssub.s32 %s20, %s39
      %s41 = ssub.s32 %s22, %s31
      %s42 = sor.u32 %s40, %s41
      %p43 = scmp.eq.s32.totalorder %s42, 0
      %s45 = sadd.s32 %s44, 1
      %s46 = scalar_select %p43, %s44, %s45
      %p49 = pneg %p43
      %p50 = scmp.eq.s32.totalorder %s13, 1
      %p51 = por %p49, %p50
      %p52 = scmp.ne.s32.totalorder %s44, %s47
      %p53 = scmp.eq.s32.totalorder %s13, 0
      %p54 = por %p52, %p53
      %p55 = scmp.ne.s32.totalorder %s44, %s47
      %p56 = scmp.eq.s32.totalorder %s18, 1
      %p57 = por %p55, %p56
      %p58 = scmp.ne.s32.totalorder %s47, %s48
      %p59 = scmp.eq.s32.totalorder %s18, 0
      %p60 = por %p58, %p59
      %p61 = scmp.ne.s32.totalorder %s47, %s48
      %p62 = scmp.eq.s32.totalorder %s19, 1
      %p63 = por %p61, %p62
      %p65 = scmp.ne.s32.totalorder %s48, %s64
      %p66 = scmp.eq.s32.totalorder %s19, 0
      %p67 = por %p65, %p66
      %s68 = ssub.s32 %s22, %s31
      %s69 = ssub.s32 %s21, %s35
      %s70 = sor.u32 %s68, %s69
      %p71 = scmp.eq.s32.totalorder %s70, 0
      %s73 = sadd.s32 %s72, 1
      %s74 = scalar_select %p71, %s72, %s73
      %p77 = pneg %p71
      %p78 = scmp.eq.s32.totalorder %s13, 1
      %p79 = por %p77, %p78
      %p80 = scmp.ne.s32.totalorder %s72, %s75
      %p81 = scmp.eq.s32.totalorder %s13, 0
      %p82 = por %p80, %p81
      %p83 = scmp.ne.s32.totalorder %s72, %s75
      %p84 = scmp.eq.s32.totalorder %s18, 1
      %p85 = por %p83, %p84
      %p86 = scmp.ne.s32.totalorder %s75, %s76
      %p87 = scmp.eq.s32.totalorder %s18, 0
      %p88 = por %p86, %p87
      %p89 = scmp.ne.s32.totalorder %s75, %s76
      %p90 = scmp.eq.s32.totalorder %s19, 1
      %p91 = por %p89, %p90
      %p93 = scmp.ne.s32.totalorder %s76, %s92
      %p94 = scmp.eq.s32.totalorder %s19, 0
      %p95 = por %p93, %p94
      %s96 = ssub.s32 %s21, %s35
      %p97 = scmp.eq.s32.totalorder %s96, 0
      %s99 = sadd.s32 %s98, 1
      %s100 = scalar_select %p97, %s98, %s99
      %p103 = pneg %p97
      %p104 = scmp.eq.s32.totalorder %s13, 1
      %p105 = por %p103, %p104
      %p106 = scmp.ne.s32.totalorder %s98, %s101
      %p107 = scmp.eq.s32.totalorder %s13, 0
      %p108 = por %p106, %p107
      %p109 = scmp.ne.s32.totalorder %s98, %s101
      %p110 = scmp.eq.s32.totalorder %s18, 1
      %p111 = por %p109, %p110
      %p112 = scmp.ne.s32.totalorder %s101, %s102
      %p113 = scmp.eq.s32.totalorder %s18, 0
      %p114 = por %p112, %p113
      %p115 = scmp.ne.s32.totalorder %s101, %s102
      %p116 = scmp.eq.s32.totalorder %s19, 1
      %p117 = por %p115, %p116
      %p119 = scmp.ne.s32.totalorder %s102, %s118
      %p120 = scmp.eq.s32.totalorder %s19, 0
      %p121 = por %p119, %p120
      %s122 = ssub.s32 %s21, %s35
      %p123 = scmp.eq.s32.totalorder %s122, 0
      %s125 = sadd.s32 %s124, 1
      %s126 = scalar_select %p123, %s124, %s125
      %p129 = pneg %p123
      %p130 = scmp.eq.s32.totalorder %s13, 1
      %p131 = por %p129, %p130
      %p132 = scmp.ne.s32.totalorder %s124, %s127
      %p133 = scmp.eq.s32.totalorder %s13, 0
      %p134 = por %p132, %p133
      %p135 = scmp.ne.s32.totalorder %s124, %s127
      %p136 = scmp.eq.s32.totalorder %s18, 1
      %p137 = por %p135, %p136
      %p138 = scmp.ne.s32.totalorder %s127, %s128
      %p139 = scmp.eq.s32.totalorder %s18, 0
      %p140 = por %p138, %p139
      %p141 = scmp.ne.s32.totalorder %s127, %s128
      %p142 = scmp.eq.s32.totalorder %s19, 1
      %p143 = por %p141, %p142
      %p145 = scmp.ne.s32.totalorder %s128, %s144
      %p146 = scmp.eq.s32.totalorder %s19, 0
      %p147 = por %p145, %p146
      %s148 = ssub.s32 %s20, %s39
      %s149 = ssub.s32 %s21, %s35
      %s150 = sor.u32 %s148, %s149
      %p151 = scmp.eq.s32.totalorder %s150, 0
      %s153 = sadd.s32 %s152, 1
      %s154 = scalar_select %p151, %s152, %s153
      %p157 = pneg %p151
      %p158 = scmp.eq.s32.totalorder %s13, 1
      %p159 = por %p157, %p158
      %p160 = scmp.ne.s32.totalorder %s152, %s155
      %p161 = scmp.eq.s32.totalorder %s13, 0
      %p162 = por %p160, %p161
      %p163 = scmp.ne.s32.totalorder %s152, %s155
      %p164 = scmp.eq.s32.totalorder %s18, 1
      %p165 = por %p163, %p164
      %p166 = scmp.ne.s32.totalorder %s155, %s156
      %p167 = scmp.eq.s32.totalorder %s18, 0
      %p168 = por %p166, %p167
      %p169 = scmp.ne.s32.totalorder %s155, %s156
      %p170 = scmp.eq.s32.totalorder %s19, 1
      %p171 = por %p169, %p170
      %p173 = scmp.ne.s32.totalorder %s156, %s172
      %p174 = scmp.eq.s32.totalorder %s19, 0
      %p175 = por %p173, %p174
      %p176 = scmp.le.s32.totalorder 1, %s13
      %p177 = scmp.lt.s32.totalorder %s13, 3
      %p178 = pnand %p176, %p177
      %p179 = pneg %p178
      // Predicated region
      $region9: #{conv_bn.1} parent=5 // pred_check
        _
      $region10: #{conv_bn.1} parent=5 // pred_check_branch
        %181 = sbr.rel (%p178) target = $region12
      $region11: #{conv_bn.1} parent=5 // pred_region
        %s182 = ssub.s32 %s13, 1
        // Predicated region
        $region13: #{conv_bn.1} parent=11 // pred_check
          %p183 = pneg %p88
        $region14: #{conv_bn.1} parent=11 // pred_check_branch
          %185 = sbr.rel (%p183) target = $region16
        $region15: #{conv_bn.1} parent=11 // pred_region
          %s186 = smul.u32 32, %s25
          %p187 = scmp.lt.s32.totalorder %s186, 31
          %s188 = scalar_select %p187, %s186, 31
          %p189 = scmp.lt.s32.totalorder %s24, 0
          %s190 = scalar_select %p189, %s24, 0
          %s191 = sadd.s32 %s190, %s188
          %s192 = smul.addr %s191, 4
          %s193 = scalar_lea.vmem %s1, %s192
          %s194 = smul.u32 32, %s25
        $region16: #{conv_bn.1} parent=11 // pred_fallthru
          _
        // Predicated region
        $region17: #{conv_bn.1} parent=11 // pred_check
          %p195 = pneg %p114
        $region18: #{conv_bn.1} parent=11 // pred_check_branch
          %197 = sbr.rel (%p195) target = $region20
        $region19: #{conv_bn.1} parent=11 // pred_region
          %p198 = scmp.lt.s32.totalorder %s24, 0
          %s199 = scalar_select %p198, %s24, 0
          %s200 = scalar_lea.vmem %s2, %s199
        $region20: #{conv_bn.1} parent=11 // pred_fallthru
          _
        // Predicated region
        $region21: #{conv_bn.1} parent=11 // pred_check
          %p201 = pneg %p140
        $region22: #{conv_bn.1} parent=11 // pred_check_branch
          %203 = sbr.rel (%p201) target = $region24
        $region23: #{conv_bn.1} parent=11 // pred_region
          %p204 = scmp.lt.s32.totalorder %s24, 0
          %s205 = scalar_select %p204, %s24, 0
          %s206 = scalar_lea.vmem %s3, %s205
        $region24: #{conv_bn.1} parent=11 // pred_fallthru
          _
      $region12: #{conv_bn.1} parent=5 // pred_fallthru
        _
      %p207 = scmp.lt.s32.totalorder %s13, 2
      // Predicated region
      $region25: #{conv_bn.1} parent=5 // pred_check
        %p208 = pneg %p207
      $region26: #{conv_bn.1} parent=5 // pred_check_branch
        %210 = sbr.rel (%p208) target = $region28
      $region27: #{conv_bn.1} parent=5 // pred_region
        // Predicated region
        $region29: #{conv_bn.1} parent=27 // pred_check
          %p211 = pneg %p54
        $region30: #{conv_bn.1} parent=27 // pred_check_branch
          %213 = sbr.rel (%p211) target = $region32
        $region31: #{conv_bn.1} parent=27 // pred_region
          %s214 = smul.u32 32, %s20
          %s215 = smul.u32 2, %s22
          %p216 = scmp.lt.s32.totalorder %s214, 63
          %s217 = scalar_select %p216, %s214, 63
          %p218 = scmp.lt.s32.totalorder %s215, 1
          %s219 = scalar_select %p218, %s215, 1
          %s220 = smul.addr %s217, 2
          %s221 = sadd.s32 %s219, %s220
          %s222 = smul.addr %s221, 4
          %s223 = scalar_lea.vmem %s0, %s222
          %s224 = smul.u32 32, %s20
          %s225 = smul.u32 2, %s22
        $region32: #{conv_bn.1} parent=27 // pred_fallthru
          _
      $region28: #{conv_bn.1} parent=5 // pred_fallthru
        _
      %p226 = scmp.le.s32.totalorder 1, %s13
      %p227 = scmp.lt.s32.totalorder %s13, 3
      %p228 = pnand %p226, %p227
      %p229 = pneg %p228
      // Predicated region
      $region33: #{conv_bn.1} parent=5 // pred_check
        _
      $region34: #{conv_bn.1} parent=5 // pred_check_branch
        %231 = sbr.rel (%p228) target = $region36
      $region35: #{conv_bn.1} parent=5 // pred_region
        %s232 = ssub.s32 %s13, 1
        %s233 = smul.u32 32, %s23
        %s234 = smul.u32 2, %s25
        %p235 = scmp.lt.s32.totalorder %s233, 63
        %s236 = scalar_select %p235, %s233, 63
        %p237 = scmp.lt.s32.totalorder %s234, 1
        %s238 = scalar_select %p237, %s234, 1
        %s239 = smul.addr %s236, 2
        %s240 = sadd.s32 %s238, %s239
        %s241 = smul.addr %s240, 4
        %s242 = scalar_lea.vmem %s0, %s241
        %p243 = pneg %p60
        %p244 = pneg %p57
        %s245 = smul.u32 32, %s25
        %p246 = scmp.lt.s32.totalorder %s245, 31
        %s247 = scalar_select %p246, %s245, 31
        %p248 = scmp.lt.s32.totalorder %s24, 0
        %s249 = scalar_select %p248, %s24, 0
        %s250 = sadd.s32 %s249, %s247
        %s251 = smul.addr %s250, 4
        %s252 = scalar_lea.vmem %s1, %s251
        %p253 = pneg %p88
        %p254 = pneg %p85
        %p255 = scmp.lt.s32.totalorder %s24, 0
        %s256 = scalar_select %p255, %s24, 0
        %s257 = scalar_lea.vmem %s2, %s256
        %p258 = pneg %p114
        %p259 = pneg %p111
        %p260 = scmp.lt.s32.totalorder %s24, 0
        %s261 = scalar_select %p260, %s24, 0
        %s262 = scalar_lea.vmem %s3, %s261
        %p263 = pneg %p140
        %p264 = pneg %p137
        %p265 = pneg %p168
        %p266 = pneg %p165
        %s267 = sand.u32 %s155, 1
        %s268 = scalar_lea.sflag [#allocation4], %s267
        %s269 = sand.u32 %s155, 1
        %s270 = smul.addr %s269, 128
        %s271 = scalar_lea.vmem [#allocation3], %s270
        %s272 = smul.u32 32, %s23
        %s273 = smul.u32 2, %s25
        %p274 = scmp.lt.s32.totalorder %s272, 63
        %s275 = scalar_select %p274, %s272, 63
        %p276 = scmp.lt.s32.totalorder %s273, 1
        %s277 = scalar_select %p276, %s273, 1
        %s278 = smul.addr %s275, 2
        %s279 = sadd.s32 %s277, %s278
        %s280 = smul.addr %s279, 4
        %s281 = scalar_lea.vmem %s0, %s280
        %s282 = smul.u32 32, %s23
        %s283 = smul.u32 2, %s25
        %s284 = smul.u32 32, %s25
        %p285 = scmp.lt.s32.totalorder %s284, 31
        %s286 = scalar_select %p285, %s284, 31
        %p287 = scmp.lt.s32.totalorder %s24, 0
        %s288 = scalar_select %p287, %s24, 0
        %s289 = sadd.s32 %s288, %s286
        %s290 = smul.addr %s289, 4
        %s291 = scalar_lea.vmem %s1, %s290
        %s292 = smul.u32 32, %s25
        %p293 = scmp.lt.s32.totalorder %s24, 0
        %s294 = scalar_select %p293, %s24, 0
        %s295 = scalar_lea.vmem %s2, %s294
        %p296 = scmp.lt.s32.totalorder %s24, 0
        %s297 = scalar_select %p296, %s24, 0
        %s298 = scalar_lea.vmem %s3, %s297
        %s299 = smul.u32 32, %s23
        %p300 = scmp.eq.s32.totalorder %s25, 0
        // Predicated region
        $region37: #{conv_bn.1} parent=35 // pred_check
          %p301 = pneg %p300
        $region38: #{conv_bn.1} parent=35 // pred_check_branch
          %303 = sbr.rel (%p301) target = $region40
        $region39: #{conv_bn.1} parent=35 // pred_region
          %304 = vst [vmem:[#allocation2] sm:$0xff] 0.0
          %305 = vst [vmem:[#allocation2 + $0x8] sm:$0xff] 0.0
          %306 = vst [vmem:[#allocation2 + $0x10] sm:$0xff] 0.0
          %307 = vst [vmem:[#allocation2 + $0x18] sm:$0xff] 0.0
          %308 = vst [vmem:[#allocation2 + $0x20] sm:$0xff] 0.0
          %309 = vst [vmem:[#allocation2 + $0x28] sm:$0xff] 0.0
          %310 = vst [vmem:[#allocation2 + $0x30] sm:$0xff] 0.0
          %311 = vst [vmem:[#allocation2 + $0x38] sm:$0xff] 0.0
          %312 = vst [vmem:[#allocation2 + $0x40] sm:$0xff] 0.0
          %313 = vst [vmem:[#allocation2 + $0x48] sm:$0xff] 0.0
          %314 = vst [vmem:[#allocation2 + $0x50] sm:$0xff] 0.0
          %315 = vst [vmem:[#allocation2 + $0x58] sm:$0xff] 0.0
          %316 = vst [vmem:[#allocation2 + $0x60] sm:$0xff] 0.0
          %317 = vst [vmem:[#allocation2 + $0x68] sm:$0xff] 0.0
          %318 = vst [vmem:[#allocation2 + $0x70] sm:$0xff] 0.0
          %319 = vst [vmem:[#allocation2 + $0x78] sm:$0xff] 0.0
          %320 = vst [vmem:[#allocation2 + $0x80] sm:$0xff] 0.0
          %321 = vst [vmem:[#allocation2 + $0x88] sm:$0xff] 0.0
          %322 = vst [vmem:[#allocation2 + $0x90] sm:$0xff] 0.0
          %323 = vst [vmem:[#allocation2 + $0x98] sm:$0xff] 0.0
          %324 = vst [vmem:[#allocation2 + $0xa0] sm:$0xff] 0.0
          %325 = vst [vmem:[#allocation2 + $0xa8] sm:$0xff] 0.0
          %326 = vst [vmem:[#allocation2 + $0xb0] sm:$0xff] 0.0
          %327 = vst [vmem:[#allocation2 + $0xb8] sm:$0xff] 0.0
          %328 = vst [vmem:[#allocation2 + $0xc0] sm:$0xff] 0.0
          %329 = vst [vmem:[#allocation2 + $0xc8] sm:$0xff] 0.0
          %330 = vst [vmem:[#allocation2 + $0xd0] sm:$0xff] 0.0
          %331 = vst [vmem:[#allocation2 + $0xd8] sm:$0xff] 0.0
          %332 = vst [vmem:[#allocation2 + $0xe0] sm:$0xff] 0.0
          %333 = vst [vmem:[#allocation2 + $0xe8] sm:$0xff] 0.0
          %334 = vst [vmem:[#allocation2 + $0xf0] sm:$0xff] 0.0
          %335 = vst [vmem:[#allocation2 + $0xf8] sm:$0xff] 0.0
        $region40: #{conv_bn.1} parent=35 // pred_fallthru
          _
        %v336 = vld [vmem:[#allocation2] sm:$0xff]
        %v337 = vld [vmem:[#allocation2 + $0x8] sm:$0xff]
        %v338 = vld [vmem:[#allocation2 + $0x10] sm:$0xff]
        %v339 = vld [vmem:[#allocation2 + $0x18] sm:$0xff]
        %v340 = vld [vmem:[#allocation2 + $0x20] sm:$0xff]
        %v341 = vld [vmem:[#allocation2 + $0x28] sm:$0xff]
        %v342 = vld [vmem:[#allocation2 + $0x30] sm:$0xff]
        %v343 = vld [vmem:[#allocation2 + $0x38] sm:$0xff]
        %v344 = vld [vmem:[#allocation2 + $0x40] sm:$0xff]
        %v345 = vld [vmem:[#allocation2 + $0x48] sm:$0xff]
        %v346 = vld [vmem:[#allocation2 + $0x50] sm:$0xff]
        %v347 = vld [vmem:[#allocation2 + $0x58] sm:$0xff]
        %v348 = vld [vmem:[#allocation2 + $0x60] sm:$0xff]
        %v349 = vld [vmem:[#allocation2 + $0x68] sm:$0xff]
        %v350 = vld [vmem:[#allocation2 + $0x70] sm:$0xff]
        %v351 = vld [vmem:[#allocation2 + $0x78] sm:$0xff]
        %v352 = vld [vmem:[#allocation2 + $0x80] sm:$0xff]
        %v353 = vld [vmem:[#allocation2 + $0x88] sm:$0xff]
        %v354 = vld [vmem:[#allocation2 + $0x90] sm:$0xff]
        %v355 = vld [vmem:[#allocation2 + $0x98] sm:$0xff]
        %v356 = vld [vmem:[#allocation2 + $0xa0] sm:$0xff]
        %v357 = vld [vmem:[#allocation2 + $0xa8] sm:$0xff]
        %v358 = vld [vmem:[#allocation2 + $0xb0] sm:$0xff]
        %v359 = vld [vmem:[#allocation2 + $0xb8] sm:$0xff]
        %v360 = vld [vmem:[#allocation2 + $0xc0] sm:$0xff]
        %v361 = vld [vmem:[#allocation2 + $0xc8] sm:$0xff]
        %v362 = vld [vmem:[#allocation2 + $0xd0] sm:$0xff]
        %v363 = vld [vmem:[#allocation2 + $0xd8] sm:$0xff]
        %v364 = vld [vmem:[#allocation2 + $0xe0] sm:$0xff]
        %v365 = vld [vmem:[#allocation2 + $0xe8] sm:$0xff]
        %v366 = vld [vmem:[#allocation2 + $0xf0] sm:$0xff]
        %v367 = vld [vmem:[#allocation2 + $0xf8] sm:$0xff]
        %v368 = vld [vmem:[%s281] sm:$0xff]
        %v369 = vld [vmem:[%s281 + $0x8] sm:$0xff]
        %v370 = vld [vmem:[%s281 + $0x10] sm:$0xff]
        %v371 = vld [vmem:[%s281 + $0x18] sm:$0xff]
        %v372 = vld [vmem:[%s281 + $0x20] sm:$0xff]
        %v373 = vld [vmem:[%s281 + $0x28] sm:$0xff]
        %v374 = vld [vmem:[%s281 + $0x30] sm:$0xff]
        %v375 = vld [vmem:[%s281 + $0x38] sm:$0xff]
        %v376 = vld [vmem:[%s281 + $0x40] sm:$0xff]
        %v377 = vld [vmem:[%s281 + $0x48] sm:$0xff]
        %v378 = vld [vmem:[%s281 + $0x50] sm:$0xff]
        %v379 = vld [vmem:[%s281 + $0x58] sm:$0xff]
        %v380 = vld [vmem:[%s281 + $0x60] sm:$0xff]
        %v381 = vld [vmem:[%s281 + $0x68] sm:$0xff]
        %v382 = vld [vmem:[%s281 + $0x70] sm:$0xff]
        %v383 = vld [vmem:[%s281 + $0x78] sm:$0xff]
        %v384 = vld [vmem:[%s281 + $0x80] sm:$0xff]
        %v385 = vld [vmem:[%s281 + $0x88] sm:$0xff]
        %v386 = vld [vmem:[%s281 + $0x90] sm:$0xff]
        %v387 = vld [vmem:[%s281 + $0x98] sm:$0xff]
        %v388 = vld [vmem:[%s281 + $0xa0] sm:$0xff]
        %v389 = vld [vmem:[%s281 + $0xa8] sm:$0xff]
        %v390 = vld [vmem:[%s281 + $0xb0] sm:$0xff]
        %v391 = vld [vmem:[%s281 + $0xb8] sm:$0xff]
        %v392 = vld [vmem:[%s281 + $0xc0] sm:$0xff]
        %v393 = vld [vmem:[%s281 + $0xc8] sm:$0xff]
        %v394 = vld [vmem:[%s281 + $0xd0] sm:$0xff]
        %v395 = vld [vmem:[%s281 + $0xd8] sm:$0xff]
        %v396 = vld [vmem:[%s281 + $0xe0] sm:$0xff]
        %v397 = vld [vmem:[%s281 + $0xe8] sm:$0xff]
        %v398 = vld [vmem:[%s281 + $0xf0] sm:$0xff]
        %v399 = vld [vmem:[%s281 + $0xf8] sm:$0xff]
        %v400 = vld [vmem:[%s291] sm:$0xf]
        %v401 = vld [vmem:[%s291 + $0x4] sm:$0xf]
        %v402 = vld [vmem:[%s291 + $0x8] sm:$0xf]
        %v403 = vld [vmem:[%s291 + $0xc] sm:$0xf]
        %v404 = vld [vmem:[%s291 + $0x10] sm:$0xf]
        %v405 = vld [vmem:[%s291 + $0x14] sm:$0xf]
        %v406 = vld [vmem:[%s291 + $0x18] sm:$0xf]
        %v407 = vld [vmem:[%s291 + $0x1c] sm:$0xf]
        %v408 = vld [vmem:[%s291 + $0x20] sm:$0xf]
        %v409 = vld [vmem:[%s291 + $0x24] sm:$0xf]
        %v410 = vld [vmem:[%s291 + $0x28] sm:$0xf]
        %v411 = vld [vmem:[%s291 + $0x2c] sm:$0xf]
        %v412 = vld [vmem:[%s291 + $0x30] sm:$0xf]
        %v413 = vld [vmem:[%s291 + $0x34] sm:$0xf]
        %v414 = vld [vmem:[%s291 + $0x38] sm:$0xf]
        %v415 = vld [vmem:[%s291 + $0x3c] sm:$0xf]
        %v416 = vld [vmem:[%s291 + $0x40] sm:$0xf]
        %v417 = vld [vmem:[%s291 + $0x44] sm:$0xf]
        %v418 = vld [vmem:[%s291 + $0x48] sm:$0xf]
        %v419 = vld [vmem:[%s291 + $0x4c] sm:$0xf]
        %v420 = vld [vmem:[%s291 + $0x50] sm:$0xf]
        %v421 = vld [vmem:[%s291 + $0x54] sm:$0xf]
        %v422 = vld [vmem:[%s291 + $0x58] sm:$0xf]
        %v423 = vld [vmem:[%s291 + $0x5c] sm:$0xf]
        %v424 = vld [vmem:[%s291 + $0x60] sm:$0xf]
        %v425 = vld [vmem:[%s291 + $0x64] sm:$0xf]
        %v426 = vld [vmem:[%s291 + $0x68] sm:$0xf]
        %v427 = vld [vmem:[%s291 + $0x6c] sm:$0xf]
        %v428 = vld [vmem:[%s291 + $0x70] sm:$0xf]
        %v429 = vld [vmem:[%s291 + $0x74] sm:$0xf]
        %v430 = vld [vmem:[%s291 + $0x78] sm:$0xf]
        %v431 = vld [vmem:[%s291 + $0x7c] sm:$0xf]
        %v464 = vunpack.c.l.b16 %v368
        %v465 = vunpack.c.h.b16 %v368
        %v466 = vunpack.c.l.b16 %v369
        %v467 = vunpack.c.h.b16 %v369
        %v468 = vunpack.c.l.b16 %v370
        %v469 = vunpack.c.h.b16 %v370
        %v470 = vunpack.c.l.b16 %v371
        %v471 = vunpack.c.h.b16 %v371
        %v472 = vunpack.c.l.b16 %v372
        %v473 = vunpack.c.h.b16 %v372
        %v474 = vunpack.c.l.b16 %v373
        %v475 = vunpack.c.h.b16 %v373
        %v476 = vunpack.c.l.b16 %v374
        %v477 = vunpack.c.h.b16 %v374
        %v478 = vunpack.c.l.b16 %v375
        %v479 = vunpack.c.h.b16 %v375
        %v480 = vunpack.c.l.b16 %v376
        %v481 = vunpack.c.h.b16 %v376
        %v482 = vunpack.c.l.b16 %v377
        %v483 = vunpack.c.h.b16 %v377
        %v484 = vunpack.c.l.b16 %v378
        %v485 = vunpack.c.h.b16 %v378
        %v486 = vunpack.c.l.b16 %v379
        %v487 = vunpack.c.h.b16 %v379
        %v488 = vunpack.c.l.b16 %v380
        %v489 = vunpack.c.h.b16 %v380
        %v490 = vunpack.c.l.b16 %v381
        %v491 = vunpack.c.h.b16 %v381
        %v492 = vunpack.c.l.b16 %v382
        %v493 = vunpack.c.h.b16 %v382
        %v494 = vunpack.c.l.b16 %v383
        %v495 = vunpack.c.h.b16 %v383
        %v496 = vunpack.c.l.b16 %v384
        %v497 = vunpack.c.h.b16 %v384
        %v498 = vunpack.c.l.b16 %v385
        %v499 = vunpack.c.h.b16 %v385
        %v500 = vunpack.c.l.b16 %v386
        %v501 = vunpack.c.h.b16 %v386
        %v502 = vunpack.c.l.b16 %v387
        %v503 = vunpack.c.h.b16 %v387
        %v504 = vunpack.c.l.b16 %v388
        %v505 = vunpack.c.h.b16 %v388
        %v506 = vunpack.c.l.b16 %v389
        %v507 = vunpack.c.h.b16 %v389
        %v508 = vunpack.c.l.b16 %v390
        %v509 = vunpack.c.h.b16 %v390
        %v510 = vunpack.c.l.b16 %v391
        %v511 = vunpack.c.h.b16 %v391
        %v512 = vunpack.c.l.b16 %v392
        %v513 = vunpack.c.h.b16 %v392
        %v514 = vunpack.c.l.b16 %v393
        %v515 = vunpack.c.h.b16 %v393
        %v516 = vunpack.c.l.b16 %v394
        %v517 = vunpack.c.h.b16 %v394
        %v518 = vunpack.c.l.b16 %v395
        %v519 = vunpack.c.h.b16 %v395
        %v520 = vunpack.c.l.b16 %v396
        %v521 = vunpack.c.h.b16 %v396
        %v522 = vunpack.c.l.b16 %v397
        %v523 = vunpack.c.h.b16 %v397
        %v524 = vunpack.c.l.b16 %v398
        %v525 = vunpack.c.h.b16 %v398
        %v526 = vunpack.c.l.b16 %v399
        %v527 = vunpack.c.h.b16 %v399
        %v528 = vpack.c.b16 %v466, %v464
        %v529 = vpack.c.b16 %v467, %v465
        %v530 = vpack.c.b16 %v470, %v468
        %v531 = vpack.c.b16 %v471, %v469
        %v532 = vpack.c.b16 %v474, %v472
        %v533 = vpack.c.b16 %v475, %v473
        %v534 = vpack.c.b16 %v478, %v476
        %v535 = vpack.c.b16 %v479, %v477
        %v536 = vpack.c.b16 %v482, %v480
        %v537 = vpack.c.b16 %v483, %v481
        %v538 = vpack.c.b16 %v486, %v484
        %v539 = vpack.c.b16 %v487, %v485
        %v540 = vpack.c.b16 %v490, %v488
        %v541 = vpack.c.b16 %v491, %v489
        %v542 = vpack.c.b16 %v494, %v492
        %v543 = vpack.c.b16 %v495, %v493
        %v544 = vpack.c.b16 %v498, %v496
        %v545 = vpack.c.b16 %v499, %v497
        %v546 = vpack.c.b16 %v502, %v500
        %v547 = vpack.c.b16 %v503, %v501
        %v548 = vpack.c.b16 %v506, %v504
        %v549 = vpack.c.b16 %v507, %v505
        %v550 = vpack.c.b16 %v510, %v508
        %v551 = vpack.c.b16 %v511, %v509
        %v552 = vpack.c.b16 %v514, %v512
        %v553 = vpack.c.b16 %v515, %v513
        %v554 = vpack.c.b16 %v518, %v516
        %v555 = vpack.c.b16 %v519, %v517
        %v556 = vpack.c.b16 %v522, %v520
        %v557 = vpack.c.b16 %v523, %v521
        %v558 = vpack.c.b16 %v526, %v524
        %v559 = vpack.c.b16 %v527, %v525
        %v624 = vunpack.c.l.b16 %v400
        %v625 = vunpack.c.l.b16 %v401
        %v626 = vunpack.c.l.b16 %v402
        %v627 = vunpack.c.l.b16 %v403
        %v628 = vunpack.c.l.b16 %v404
        %v629 = vunpack.c.l.b16 %v405
        %v630 = vunpack.c.l.b16 %v406
        %v631 = vunpack.c.l.b16 %v407
        %v632 = vunpack.c.l.b16 %v408
        %v633 = vunpack.c.l.b16 %v409
        %v634 = vunpack.c.l.b16 %v410
        %v635 = vunpack.c.l.b16 %v411
        %v636 = vunpack.c.l.b16 %v412
        %v637 = vunpack.c.l.b16 %v413
        %v638 = vunpack.c.l.b16 %v414
        %v639 = vunpack.c.l.b16 %v415
        %v640 = vunpack.c.l.b16 %v416
        %v641 = vunpack.c.l.b16 %v417
        %v642 = vunpack.c.l.b16 %v418
        %v643 = vunpack.c.l.b16 %v419
        %v644 = vunpack.c.l.b16 %v420
        %v645 = vunpack.c.l.b16 %v421
        %v646 = vunpack.c.l.b16 %v422
        %v647 = vunpack.c.l.b16 %v423
        %v648 = vunpack.c.l.b16 %v424
        %v649 = vunpack.c.l.b16 %v425
        %v650 = vunpack.c.l.b16 %v426
        %v651 = vunpack.c.l.b16 %v427
        %v652 = vunpack.c.l.b16 %v428
        %v653 = vunpack.c.l.b16 %v429
        %v654 = vunpack.c.l.b16 %v430
        %v655 = vunpack.c.l.b16 %v431
        %v656 = vpack.c.b16 %v625, %v624
        %v657 = vpack.c.b16 %v627, %v626
        %v658 = vpack.c.b16 %v629, %v628
        %v659 = vpack.c.b16 %v631, %v630
        %v660 = vpack.c.b16 %v633, %v632
        %v661 = vpack.c.b16 %v635, %v634
        %v662 = vpack.c.b16 %v637, %v636
        %v663 = vpack.c.b16 %v639, %v638
        %v664 = vpack.c.b16 %v641, %v640
        %v665 = vpack.c.b16 %v643, %v642
        %v666 = vpack.c.b16 %v645, %v644
        %v667 = vpack.c.b16 %v647, %v646
        %v668 = vpack.c.b16 %v649, %v648
        %v669 = vpack.c.b16 %v651, %v650
        %v670 = vpack.c.b16 %v653, %v652
        %v671 = vpack.c.b16 %v655, %v654
        %688 = vmatpush.bf16.msra.mxu0 %v663
        %689 = vmatpush.bf16.msra.mxu0 %v662
        %690 = vmatpush.bf16.msra.mxu0 %v661
        %691 = vmatpush.bf16.msra.mxu0 %v660
        %692 = vmatpush.bf16.msra.mxu0 %v659
        %693 = vmatpush.bf16.msra.mxu0 %v658
        %694 = vmatpush.bf16.msra.mxu0 %v657
        %695 = vmatpush.bf16.msra.mxu0 %v656
        %696 = vmatmul.bf16.gmra.mxu0 %v528
        %v697 = vpop.f32.mrf.mxu0
        %v698 = vadd.f32 0.0, %v697
        %v699 = vpop.f32.mrf.mxu0
        %v700 = vadd.f32 0.0, %v699
        %701 = vmatmul.bf16.gmra.mxu0 %v530
        %v702 = vpop.f32.mrf.mxu0
        %v703 = vadd.f32 0.0, %v702
        %v704 = vpop.f32.mrf.mxu0
        %v705 = vadd.f32 0.0, %v704
        %706 = vmatmul.bf16.gmra.mxu0 %v532
        %v707 = vpop.f32.mrf.mxu0
        %v708 = vadd.f32 0.0, %v707
        %v709 = vpop.f32.mrf.mxu0
        %v710 = vadd.f32 0.0, %v709
        %711 = vmatmul.bf16.gmra.mxu0 %v534
        %v712 = vpop.f32.mrf.mxu0
        %v713 = vadd.f32 0.0, %v712
        %v714 = vpop.f32.mrf.mxu0
        %v715 = vadd.f32 0.0, %v714
        %716 = vmatmul.bf16.gmra.mxu0 %v536
        %v717 = vpop.f32.mrf.mxu0
        %v718 = vadd.f32 0.0, %v717
        %v719 = vpop.f32.mrf.mxu0
        %v720 = vadd.f32 0.0, %v719
        %721 = vmatmul.bf16.gmra.mxu0 %v538
        %v722 = vpop.f32.mrf.mxu0
        %v723 = vadd.f32 0.0, %v722
        %v724 = vpop.f32.mrf.mxu0
        %v725 = vadd.f32 0.0, %v724
        %726 = vmatmul.bf16.gmra.mxu0 %v540
        %v727 = vpop.f32.mrf.mxu0
        %v728 = vadd.f32 0.0, %v727
        %v729 = vpop.f32.mrf.mxu0
        %v730 = vadd.f32 0.0, %v729
        %731 = vmatmul.bf16.gmra.mxu0 %v542
        %v732 = vpop.f32.mrf.mxu0
        %v733 = vadd.f32 0.0, %v732
        %v734 = vpop.f32.mrf.mxu0
        %v735 = vadd.f32 0.0, %v734
        %736 = vmatmul.bf16.gmra.mxu0 %v544
        %v737 = vpop.f32.mrf.mxu0
        %v738 = vadd.f32 0.0, %v737
        %v739 = vpop.f32.mrf.mxu0
        %v740 = vadd.f32 0.0, %v739
        %741 = vmatmul.bf16.gmra.mxu0 %v546
        %v742 = vpop.f32.mrf.mxu0
        %v743 = vadd.f32 0.0, %v742
        %v744 = vpop.f32.mrf.mxu0
        %v745 = vadd.f32 0.0, %v744
        %746 = vmatmul.bf16.gmra.mxu0 %v548
        %v747 = vpop.f32.mrf.mxu0
        %v748 = vadd.f32 0.0, %v747
        %v749 = vpop.f32.mrf.mxu0
        %v750 = vadd.f32 0.0, %v749
        %751 = vmatmul.bf16.gmra.mxu0 %v550
        %v752 = vpop.f32.mrf.mxu0
        %v753 = vadd.f32 0.0, %v752
        %v754 = vpop.f32.mrf.mxu0
        %v755 = vadd.f32 0.0, %v754
        %756 = vmatmul.bf16.gmra.mxu0 %v552
        %v757 = vpop.f32.mrf.mxu0
        %v758 = vadd.f32 0.0, %v757
        %v759 = vpop.f32.mrf.mxu0
        %v760 = vadd.f32 0.0, %v759
        %761 = vmatmul.bf16.gmra.mxu0 %v554
        %v762 = vpop.f32.mrf.mxu0
        %v763 = vadd.f32 0.0, %v762
        %v764 = vpop.f32.mrf.mxu0
        %v765 = vadd.f32 0.0, %v764
        %766 = vmatmul.bf16.gmra.mxu0 %v556
        %v767 = vpop.f32.mrf.mxu0
        %v768 = vadd.f32 0.0, %v767
        %v769 = vpop.f32.mrf.mxu0
        %v770 = vadd.f32 0.0, %v769
        %771 = vmatmul.bf16.gmra.mxu0 %v558
        %v772 = vpop.f32.mrf.mxu0
        %v773 = vadd.f32 0.0, %v772
        %v774 = vpop.f32.mrf.mxu0
        %v775 = vadd.f32 0.0, %v774
        %776 = vdwg.mxu0
        %777 = vmatpush.bf16.msra.mxu0 %v671
        %778 = vmatpush.bf16.msra.mxu0 %v670
        %779 = vmatpush.bf16.msra.mxu0 %v669
        %780 = vmatpush.bf16.msra.mxu0 %v668
        %781 = vmatpush.bf16.msra.mxu0 %v667
        %782 = vmatpush.bf16.msra.mxu0 %v666
        %783 = vmatpush.bf16.msra.mxu0 %v665
        %784 = vmatpush.bf16.msra.mxu0 %v664
        %785 = vmatmul.bf16.gmra.mxu0 %v529
        %v786 = vpop.f32.mrf.mxu0
        %v787 = vadd.f32 %v698, %v786
        %v788 = vpop.f32.mrf.mxu0
        %v789 = vadd.f32 %v700, %v788
        %790 = vmatmul.bf16.gmra.mxu0 %v531
        %v791 = vpop.f32.mrf.mxu0
        %v792 = vadd.f32 %v703, %v791
        %v793 = vpop.f32.mrf.mxu0
        %v794 = vadd.f32 %v705, %v793
        %795 = vmatmul.bf16.gmra.mxu0 %v533
        %v796 = vpop.f32.mrf.mxu0
        %v797 = vadd.f32 %v708, %v796
        %v798 = vpop.f32.mrf.mxu0
        %v799 = vadd.f32 %v710, %v798
        %800 = vmatmul.bf16.gmra.mxu0 %v535
        %v801 = vpop.f32.mrf.mxu0
        %v802 = vadd.f32 %v713, %v801
        %v803 = vpop.f32.mrf.mxu0
        %v804 = vadd.f32 %v715, %v803
        %805 = vmatmul.bf16.gmra.mxu0 %v537
        %v806 = vpop.f32.mrf.mxu0
        %v807 = vadd.f32 %v718, %v806
        %v808 = vpop.f32.mrf.mxu0
        %v809 = vadd.f32 %v720, %v808
        %810 = vmatmul.bf16.gmra.mxu0 %v539
        %v811 = vpop.f32.mrf.mxu0
        %v812 = vadd.f32 %v723, %v811
        %v813 = vpop.f32.mrf.mxu0
        %v814 = vadd.f32 %v725, %v813
        %815 = vmatmul.bf16.gmra.mxu0 %v541
        %v816 = vpop.f32.mrf.mxu0
        %v817 = vadd.f32 %v728, %v816
        %v818 = vpop.f32.mrf.mxu0
        %v819 = vadd.f32 %v730, %v818
        %820 = vmatmul.bf16.gmra.mxu0 %v543
        %v821 = vpop.f32.mrf.mxu0
        %v822 = vadd.f32 %v733, %v821
        %v823 = vpop.f32.mrf.mxu0
        %v824 = vadd.f32 %v735, %v823
        %825 = vmatmul.bf16.gmra.mxu0 %v545
        %v826 = vpop.f32.mrf.mxu0
        %v827 = vadd.f32 %v738, %v826
        %v828 = vpop.f32.mrf.mxu0
        %v829 = vadd.f32 %v740, %v828
        %830 = vmatmul.bf16.gmra.mxu0 %v547
        %v831 = vpop.f32.mrf.mxu0
        %v832 = vadd.f32 %v743, %v831
        %v833 = vpop.f32.mrf.mxu0
        %v834 = vadd.f32 %v745, %v833
        %835 = vmatmul.bf16.gmra.mxu0 %v549
        %v836 = vpop.f32.mrf.mxu0
        %v837 = vadd.f32 %v748, %v836
        %v838 = vpop.f32.mrf.mxu0
        %v839 = vadd.f32 %v750, %v838
        %840 = vmatmul.bf16.gmra.mxu0 %v551
        %v841 = vpop.f32.mrf.mxu0
        %v842 = vadd.f32 %v753, %v841
        %v843 = vpop.f32.mrf.mxu0
        %v844 = vadd.f32 %v755, %v843
        %845 = vmatmul.bf16.gmra.mxu0 %v553
        %v846 = vpop.f32.mrf.mxu0
        %v847 = vadd.f32 %v758, %v846
        %v848 = vpop.f32.mrf.mxu0
        %v849 = vadd.f32 %v760, %v848
        %850 = vmatmul.bf16.gmra.mxu0 %v555
        %v851 = vpop.f32.mrf.mxu0
        %v852 = vadd.f32 %v763, %v851
        %v853 = vpop.f32.mrf.mxu0
        %v854 = vadd.f32 %v765, %v853
        %855 = vmatmul.bf16.gmra.mxu0 %v557
        %v856 = vpop.f32.mrf.mxu0
        %v857 = vadd.f32 %v768, %v856
        %v858 = vpop.f32.mrf.mxu0
        %v859 = vadd.f32 %v770, %v858
        %860 = vmatmul.bf16.gmra.mxu0 %v559
        %v861 = vpop.f32.mrf.mxu0
        %v862 = vadd.f32 %v773, %v861
        %v863 = vpop.f32.mrf.mxu0
        %v864 = vadd.f32 %v775, %v863
        %865 = vdwg.mxu0
        %v866 = vadd.f32 %v336, %v787
        %v867 = vadd.f32 %v337, %v789
        %v868 = vadd.f32 %v338, %v792
        %v869 = vadd.f32 %v339, %v794
        %v870 = vadd.f32 %v340, %v797
        %v871 = vadd.f32 %v341, %v799
        %v872 = vadd.f32 %v342, %v802
        %v873 = vadd.f32 %v343, %v804
        %v874 = vadd.f32 %v344, %v807
        %v875 = vadd.f32 %v345, %v809
        %v876 = vadd.f32 %v346, %v812
        %v877 = vadd.f32 %v347, %v814
        %v878 = vadd.f32 %v348, %v817
        %v879 = vadd.f32 %v349, %v819
        %v880 = vadd.f32 %v350, %v822
        %v881 = vadd.f32 %v351, %v824
        %v882 = vadd.f32 %v352, %v827
        %v883 = vadd.f32 %v353, %v829
        %v884 = vadd.f32 %v354, %v832
        %v885 = vadd.f32 %v355, %v834
        %v886 = vadd.f32 %v356, %v837
        %v887 = vadd.f32 %v357, %v839
        %v888 = vadd.f32 %v358, %v842
        %v889 = vadd.f32 %v359, %v844
        %v890 = vadd.f32 %v360, %v847
        %v891 = vadd.f32 %v361, %v849
        %v892 = vadd.f32 %v362, %v852
        %v893 = vadd.f32 %v363, %v854
        %v894 = vadd.f32 %v364, %v857
        %v895 = vadd.f32 %v365, %v859
        %v896 = vadd.f32 %v366, %v862
        %v897 = vadd.f32 %v367, %v864
        %898 = vst [vmem:[#allocation2] sm:$0xff] %v866
        %899 = vst [vmem:[#allocation2 + $0x8] sm:$0xff] %v867
        %900 = vst [vmem:[#allocation2 + $0x10] sm:$0xff] %v868
        %901 = vst [vmem:[#allocation2 + $0x18] sm:$0xff] %v869
        %902 = vst [vmem:[#allocation2 + $0x20] sm:$0xff] %v870
        %903 = vst [vmem:[#allocation2 + $0x28] sm:$0xff] %v871
        %904 = vst [vmem:[#allocation2 + $0x30] sm:$0xff] %v872
        %905 = vst [vmem:[#allocation2 + $0x38] sm:$0xff] %v873
        %906 = vst [vmem:[#allocation2 + $0x40] sm:$0xff] %v874
        %907 = vst [vmem:[#allocation2 + $0x48] sm:$0xff] %v875
        %908 = vst [vmem:[#allocation2 + $0x50] sm:$0xff] %v876
        %909 = vst [vmem:[#allocation2 + $0x58] sm:$0xff] %v877
        %910 = vst [vmem:[#allocation2 + $0x60] sm:$0xff] %v878
        %911 = vst [vmem:[#allocation2 + $0x68] sm:$0xff] %v879
        %912 = vst [vmem:[#allocation2 + $0x70] sm:$0xff] %v880
        %913 = vst [vmem:[#allocation2 + $0x78] sm:$0xff] %v881
        %914 = vst [vmem:[#allocation2 + $0x80] sm:$0xff] %v882
        %915 = vst [vmem:[#allocation2 + $0x88] sm:$0xff] %v883
        %916 = vst [vmem:[#allocation2 + $0x90] sm:$0xff] %v884
        %917 = vst [vmem:[#allocation2 + $0x98] sm:$0xff] %v885
        %918 = vst [vmem:[#allocation2 + $0xa0] sm:$0xff] %v886
        %919 = vst [vmem:[#allocation2 + $0xa8] sm:$0xff] %v887
        %920 = vst [vmem:[#allocation2 + $0xb0] sm:$0xff] %v888
        %921 = vst [vmem:[#allocation2 + $0xb8] sm:$0xff] %v889
        %922 = vst [vmem:[#allocation2 + $0xc0] sm:$0xff] %v890
        %923 = vst [vmem:[#allocation2 + $0xc8] sm:$0xff] %v891
        %924 = vst [vmem:[#allocation2 + $0xd0] sm:$0xff] %v892
        %925 = vst [vmem:[#allocation2 + $0xd8] sm:$0xff] %v893
        %926 = vst [vmem:[#allocation2 + $0xe0] sm:$0xff] %v894
        %927 = vst [vmem:[#allocation2 + $0xe8] sm:$0xff] %v895
        %928 = vst [vmem:[#allocation2 + $0xf0] sm:$0xff] %v896
        %929 = vst [vmem:[#allocation2 + $0xf8] sm:$0xff] %v897
        // Predicated region
        $region41: #{conv_bn.1} parent=35 // pred_check
          %p930 = pneg %p300
        $region42: #{conv_bn.1} parent=35 // pred_check_branch
          %932 = sbr.rel (%p930) target = $region44
        $region43: #{conv_bn.1} parent=35 // pred_region
          %v933 = vld [vmem:[#allocation2] sm:$0xff]
          %v934 = vld [vmem:[#allocation2 + $0x8] sm:$0xff]
          %v935 = vld [vmem:[#allocation2 + $0x10] sm:$0xff]
          %v936 = vld [vmem:[#allocation2 + $0x18] sm:$0xff]
          %v937 = vld [vmem:[#allocation2 + $0x20] sm:$0xff]
          %v938 = vld [vmem:[#allocation2 + $0x28] sm:$0xff]
          %v939 = vld [vmem:[#allocation2 + $0x30] sm:$0xff]
          %v940 = vld [vmem:[#allocation2 + $0x38] sm:$0xff]
          %v941 = vld [vmem:[#allocation2 + $0x40] sm:$0xff]
          %v942 = vld [vmem:[#allocation2 + $0x48] sm:$0xff]
          %v943 = vld [vmem:[#allocation2 + $0x50] sm:$0xff]
          %v944 = vld [vmem:[#allocation2 + $0x58] sm:$0xff]
          %v945 = vld [vmem:[#allocation2 + $0x60] sm:$0xff]
          %v946 = vld [vmem:[#allocation2 + $0x68] sm:$0xff]
          %v947 = vld [vmem:[#allocation2 + $0x70] sm:$0xff]
          %v948 = vld [vmem:[#allocation2 + $0x78] sm:$0xff]
          %v949 = vld [vmem:[#allocation2 + $0x80] sm:$0xff]
          %v950 = vld [vmem:[#allocation2 + $0x88] sm:$0xff]
          %v951 = vld [vmem:[#allocation2 + $0x90] sm:$0xff]
          %v952 = vld [vmem:[#allocation2 + $0x98] sm:$0xff]
          %v953 = vld [vmem:[#allocation2 + $0xa0] sm:$0xff]
          %v954 = vld [vmem:[#allocation2 + $0xa8] sm:$0xff]
          %v955 = vld [vmem:[#allocation2 + $0xb0] sm:$0xff]
          %v956 = vld [vmem:[#allocation2 + $0xb8] sm:$0xff]
          %v957 = vld [vmem:[#allocation2 + $0xc0] sm:$0xff]
          %v958 = vld [vmem:[#allocation2 + $0xc8] sm:$0xff]
          %v959 = vld [vmem:[#allocation2 + $0xd0] sm:$0xff]
          %v960 = vld [vmem:[#allocation2 + $0xd8] sm:$0xff]
          %v961 = vld [vmem:[#allocation2 + $0xe0] sm:$0xff]
          %v962 = vld [vmem:[#allocation2 + $0xe8] sm:$0xff]
          %v963 = vld [vmem:[#allocation2 + $0xf0] sm:$0xff]
          %v964 = vld [vmem:[#allocation2 + $0xf8] sm:$0xff]
          %v965 = vld [vmem:[%s295] sm:$0x1]
          %v967 = vperm.slane %v965, 0
          %v969 = vmul.f32 %v933, %v967
          %v970 = vmul.f32 %v934, %v967
          %v971 = vmul.f32 %v935, %v967
          %v972 = vmul.f32 %v936, %v967
          %v973 = vmul.f32 %v937, %v967
          %v974 = vmul.f32 %v938, %v967
          %v975 = vmul.f32 %v939, %v967
          %v976 = vmul.f32 %v940, %v967
          %v977 = vmul.f32 %v941, %v967
          %v978 = vmul.f32 %v942, %v967
          %v979 = vmul.f32 %v943, %v967
          %v980 = vmul.f32 %v944, %v967
          %v981 = vmul.f32 %v945, %v967
          %v982 = vmul.f32 %v946, %v967
          %v983 = vmul.f32 %v947, %v967
          %v984 = vmul.f32 %v948, %v967
          %v985 = vmul.f32 %v949, %v967
          %v986 = vmul.f32 %v950, %v967
          %v987 = vmul.f32 %v951, %v967
          %v988 = vmul.f32 %v952, %v967
          %v989 = vmul.f32 %v953, %v967
          %v990 = vmul.f32 %v954, %v967
          %v991 = vmul.f32 %v955, %v967
          %v992 = vmul.f32 %v956, %v967
          %v993 = vmul.f32 %v957, %v967
          %v994 = vmul.f32 %v958, %v967
          %v995 = vmul.f32 %v959, %v967
          %v996 = vmul.f32 %v960, %v967
          %v997 = vmul.f32 %v961, %v967
          %v998 = vmul.f32 %v962, %v967
          %v999 = vmul.f32 %v963, %v967
          %v1000 = vmul.f32 %v964, %v967
          %v1001 = vld [vmem:[%s298] sm:$0x1]
          %v1003 = vperm.slane %v1001, 0
          %v1005 = vadd.f32 %v969, %v1003
          %v1006 = vadd.f32 %v970, %v1003
          %v1007 = vadd.f32 %v971, %v1003
          %v1008 = vadd.f32 %v972, %v1003
          %v1009 = vadd.f32 %v973, %v1003
          %v1010 = vadd.f32 %v974, %v1003
          %v1011 = vadd.f32 %v975, %v1003
          %v1012 = vadd.f32 %v976, %v1003
          %v1013 = vadd.f32 %v977, %v1003
          %v1014 = vadd.f32 %v978, %v1003
          %v1015 = vadd.f32 %v979, %v1003
          %v1016 = vadd.f32 %v980, %v1003
          %v1017 = vadd.f32 %v981, %v1003
          %v1018 = vadd.f32 %v982, %v1003
          %v1019 = vadd.f32 %v983, %v1003
          %v1020 = vadd.f32 %v984, %v1003
          %v1021 = vadd.f32 %v985, %v1003
          %v1022 = vadd.f32 %v986, %v1003
          %v1023 = vadd.f32 %v987, %v1003
          %v1024 = vadd.f32 %v988, %v1003
          %v1025 = vadd.f32 %v989, %v1003
          %v1026 = vadd.f32 %v990, %v1003
          %v1027 = vadd.f32 %v991, %v1003
          %v1028 = vadd.f32 %v992, %v1003
          %v1029 = vadd.f32 %v993, %v1003
          %v1030 = vadd.f32 %v994, %v1003
          %v1031 = vadd.f32 %v995, %v1003
          %v1032 = vadd.f32 %v996, %v1003
          %v1033 = vadd.f32 %v997, %v1003
          %v1034 = vadd.f32 %v998, %v1003
          %v1035 = vadd.f32 %v999, %v1003
          %v1036 = vadd.f32 %v1000, %v1003
          %v1037 = vmax.f32 %v1005, 0.0
          %v1038 = vmax.f32 %v1006, 0.0
          %v1039 = vmax.f32 %v1007, 0.0
          %v1040 = vmax.f32 %v1008, 0.0
          %v1041 = vmax.f32 %v1009, 0.0
          %v1042 = vmax.f32 %v1010, 0.0
          %v1043 = vmax.f32 %v1011, 0.0
          %v1044 = vmax.f32 %v1012, 0.0
          %v1045 = vmax.f32 %v1013, 0.0
          %v1046 = vmax.f32 %v1014, 0.0
          %v1047 = vmax.f32 %v1015, 0.0
          %v1048 = vmax.f32 %v1016, 0.0
          %v1049 = vmax.f32 %v1017, 0.0
          %v1050 = vmax.f32 %v1018, 0.0
          %v1051 = vmax.f32 %v1019, 0.0
          %v1052 = vmax.f32 %v1020, 0.0
          %v1053 = vmax.f32 %v1021, 0.0
          %v1054 = vmax.f32 %v1022, 0.0
          %v1055 = vmax.f32 %v1023, 0.0
          %v1056 = vmax.f32 %v1024, 0.0
          %v1057 = vmax.f32 %v1025, 0.0
          %v1058 = vmax.f32 %v1026, 0.0
          %v1059 = vmax.f32 %v1027, 0.0
          %v1060 = vmax.f32 %v1028, 0.0
          %v1061 = vmax.f32 %v1029, 0.0
          %v1062 = vmax.f32 %v1030, 0.0
          %v1063 = vmax.f32 %v1031, 0.0
          %v1064 = vmax.f32 %v1032, 0.0
          %v1065 = vmax.f32 %v1033, 0.0
          %v1066 = vmax.f32 %v1034, 0.0
          %v1067 = vmax.f32 %v1035, 0.0
          %v1068 = vmax.f32 %v1036, 0.0
          %v1069 = vpack.c.bf16 %v1037, %v1037
          %v1070 = vpack.c.bf16 %v1038, %v1038
          %v1071 = vpack.c.bf16 %v1039, %v1039
          %v1072 = vpack.c.bf16 %v1040, %v1040
          %v1073 = vpack.c.bf16 %v1041, %v1041
          %v1074 = vpack.c.bf16 %v1042, %v1042
          %v1075 = vpack.c.bf16 %v1043, %v1043
          %v1076 = vpack.c.bf16 %v1044, %v1044
          %v1077 = vpack.c.bf16 %v1045, %v1045
          %v1078 = vpack.c.bf16 %v1046, %v1046
          %v1079 = vpack.c.bf16 %v1047, %v1047
          %v1080 = vpack.c.bf16 %v1048, %v1048
          %v1081 = vpack.c.bf16 %v1049, %v1049
          %v1082 = vpack.c.bf16 %v1050, %v1050
          %v1083 = vpack.c.bf16 %v1051, %v1051
          %v1084 = vpack.c.bf16 %v1052, %v1052
          %v1085 = vpack.c.bf16 %v1053, %v1053
          %v1086 = vpack.c.bf16 %v1054, %v1054
          %v1087 = vpack.c.bf16 %v1055, %v1055
          %v1088 = vpack.c.bf16 %v1056, %v1056
          %v1089 = vpack.c.bf16 %v1057, %v1057
          %v1090 = vpack.c.bf16 %v1058, %v1058
          %v1091 = vpack.c.bf16 %v1059, %v1059
          %v1092 = vpack.c.bf16 %v1060, %v1060
          %v1093 = vpack.c.bf16 %v1061, %v1061
          %v1094 = vpack.c.bf16 %v1062, %v1062
          %v1095 = vpack.c.bf16 %v1063, %v1063
          %v1096 = vpack.c.bf16 %v1064, %v1064
          %v1097 = vpack.c.bf16 %v1065, %v1065
          %v1098 = vpack.c.bf16 %v1066, %v1066
          %v1099 = vpack.c.bf16 %v1067, %v1067
          %v1100 = vpack.c.bf16 %v1068, %v1068
          %1101 = vst [vmem:[%s271] sm:$0xf] %v1069
          %1102 = vst [vmem:[%s271 + $0x4] sm:$0xf] %v1070
          %1103 = vst [vmem:[%s271 + $0x8] sm:$0xf] %v1071
          %1104 = vst [vmem:[%s271 + $0xc] sm:$0xf] %v1072
          %1105 = vst [vmem:[%s271 + $0x10] sm:$0xf] %v1073
          %1106 = vst [vmem:[%s271 + $0x14] sm:$0xf] %v1074
          %1107 = vst [vmem:[%s271 + $0x18] sm:$0xf] %v1075
          %1108 = vst [vmem:[%s271 + $0x1c] sm:$0xf] %v1076
          %1109 = vst [vmem:[%s271 + $0x20] sm:$0xf] %v1077
          %1110 = vst [vmem:[%s271 + $0x24] sm:$0xf] %v1078
          %1111 = vst [vmem:[%s271 + $0x28] sm:$0xf] %v1079
          %1112 = vst [vmem:[%s271 + $0x2c] sm:$0xf] %v1080
          %1113 = vst [vmem:[%s271 + $0x30] sm:$0xf] %v1081
          %1114 = vst [vmem:[%s271 + $0x34] sm:$0xf] %v1082
          %1115 = vst [vmem:[%s271 + $0x38] sm:$0xf] %v1083
          %1116 = vst [vmem:[%s271 + $0x3c] sm:$0xf] %v1084
          %1117 = vst [vmem:[%s271 + $0x40] sm:$0xf] %v1085
          %1118 = vst [vmem:[%s271 + $0x44] sm:$0xf] %v1086
          %1119 = vst [vmem:[%s271 + $0x48] sm:$0xf] %v1087
          %1120 = vst [vmem:[%s271 + $0x4c] sm:$0xf] %v1088
          %1121 = vst [vmem:[%s271 + $0x50] sm:$0xf] %v1089
          %1122 = vst [vmem:[%s271 + $0x54] sm:$0xf] %v1090
          %1123 = vst [vmem:[%s271 + $0x58] sm:$0xf] %v1091
          %1124 = vst [vmem:[%s271 + $0x5c] sm:$0xf] %v1092
          %1125 = vst [vmem:[%s271 + $0x60] sm:$0xf] %v1093
          %1126 = vst [vmem:[%s271 + $0x64] sm:$0xf] %v1094
          %1127 = vst [vmem:[%s271 + $0x68] sm:$0xf] %v1095
          %1128 = vst [vmem:[%s271 + $0x6c] sm:$0xf] %v1096
          %1129 = vst [vmem:[%s271 + $0x70] sm:$0xf] %v1097
          %1130 = vst [vmem:[%s271 + $0x74] sm:$0xf] %v1098
          %1131 = vst [vmem:[%s271 + $0x78] sm:$0xf] %v1099
          %1132 = vst [vmem:[%s271 + $0x7c] sm:$0xf] %v1100
        $region44: #{conv_bn.1} parent=35 // pred_fallthru
          _
        %s1133 = sand.u32 %s155, 1
        %s1134 = scalar_lea.sflag [#allocation4], %s1133
        %s1135 = sand.u32 %s155, 1
        %s1136 = smul.addr %s1135, 128
        %s1137 = scalar_lea.vmem [#allocation3], %s1136
        // Predicated region
        $region45: #{conv_bn.1} parent=35 // pred_check
          %p1138 = pneg %p165
        $region46: #{conv_bn.1} parent=35 // pred_check_branch
          %1140 = sbr.rel (%p1138) target = $region48
        $region47: #{conv_bn.1} parent=35 // pred_region
          %s1141 = smul.u32 32, %s23
          %1143 = vsyncadd %s1134, 0
          %s1144 = sadd.s32 %s24, %s1141
          %s1145 = smul.addr %s1144, 4
          %s1146 = scalar_lea.hbm %s4, %s1145
          %s1147 = sshll.u32 %s1137, 4
          %s1148 = int_to_ptr.vmem [resolvable:$true] %s1147
          %s1149 = sshll.u32 %s1146, 4
          %s1150 = int_to_ptr.hbm [resolvable:$true] %s1149
          %1155 = dma.vmem_to_hbm [thread:$0]  %s1148, 2048, %s1150, %s1134, 64, 64, 4
        $region48: #{conv_bn.1} parent=35 // pred_fallthru
          _
      $region36: #{conv_bn.1} parent=5 // pred_fallthru
        _
      %p1156 = scmp.le.s32.totalorder 2, %s13
      // Predicated region
      $region49: #{conv_bn.1} parent=5 // pred_check
        %p1157 = pneg %p1156
      $region50: #{conv_bn.1} parent=5 // pred_check_branch
        %1159 = sbr.rel (%p1157) target = $region52
      $region51: #{conv_bn.1} parent=5 // pred_region
        %s1160 = ssub.s32 %s13, 2
        // Predicated region
        $region53: #{conv_bn.1} parent=51 // pred_check
          %p1161 = pneg %p171
        $region54: #{conv_bn.1} parent=51 // pred_check_branch
          %1163 = sbr.rel (%p1161) target = $region56
        $region55: #{conv_bn.1} parent=51 // pred_region
          %s1164 = sand.u32 %s156, 1
          %s1165 = scalar_lea.sflag [#allocation4], %s1164
          %s1166 = sand.u32 %s156, 1
          %s1167 = smul.addr %s1166, 128
          %s1168 = scalar_lea.vmem [#allocation3], %s1167
          %1170 = dma.done %s1165, 2048
        $region56: #{conv_bn.1} parent=51 // pred_fallthru
          _
      $region52: #{conv_bn.1} parent=5 // pred_fallthru
        _
    $region6: #{conv_bn.1} parent=1 // loop_footer
      %s17 = sadd.s32 1, %s13
    $region7: #{conv_bn.1} parent=1 // loop_footer_branch
      %12 = sbr.rel target = $region3
    $region8: #{conv_bn.1} parent=1 // loop_exit
      _
    %1171 = vsyncpa [#allocation4], 1
    %s1172 = scalar_lea.sflag [#allocation4], 1
    %1173 = vsyncpa %s1172, 1

</llo_original>
